<compile_context>
chip_gen: v5e
topology: v5e:2x2
jax: 0.10.0
libtpu: 0.0.40
codegen_flags: <defaults>
</compile_context>

<pallas_src>
import functools

import jax
import jax.numpy as jnp
from jax.experimental import pallas as pl
from jax.experimental.pallas import tpu as pltpu

TB_MAX = 2048       # max batch tile (VMEM cost at 2048 is ~1 MiB -> trivial)


def actor_kernel(x_ref, w1_ref, b1_ref, w2_ref, b2_ref, w3_ref, b3_ref, o_ref):
    # x_ref: [TB, S] f32; weights bf16; biases f32; o_ref: [TB, A] f32
    x = x_ref[...].astype(jnp.bfloat16)                            # cast in-kernel
    h1 = jnp.dot(x, w1_ref[...], preferred_element_type=jnp.float32)
    h1 = jnp.maximum(h1 + b1_ref[...], 0.0)                        # ReLU, f32 [TB, 64]
    h2 = jnp.dot(h1.astype(jnp.bfloat16), w2_ref[...],
                 preferred_element_type=jnp.float32)
    h2 = jnp.maximum(h2 + b2_ref[...], 0.0)                        # ReLU, f32 [TB, 32]
    h3 = jnp.dot(h2.astype(jnp.bfloat16), w3_ref[...],
                 preferred_element_type=jnp.float32)
    o_ref[...] = jnp.tanh(h3 + b3_ref[...]).astype(o_ref.dtype)    # tanh, [TB, A]


def _round_up(n, m):
    return ((n + m - 1) // m) * m


def _choose_tile(B, tb_max):
    """Batch tile: multiple of 8, <= tb_max, >=2 tiles for large B (v7x 2 TCs),
    sized to minimize last-tile padding."""
    if B <= 256:
        return _round_up(max(B, 1), 8)               # single small tile
    n = max(2, -(-B // tb_max))                      # >= 2 grid steps
    return min(tb_max, _round_up(-(-B // n), 8))


@functools.partial(jax.jit, static_argnames=("tb_max",))
def actor_forward(x, params, *, tb_max=TB_MAX):
    """x: [B, state_dim] float32.  params: dict of f32 weights/biases (see init)."""
    B, S = x.shape
    A = params["w3"].shape[1]

    # bf16 matmul operands (f32 accumulation inside the kernel), biases f32.
    w1 = params["w1"].astype(jnp.bfloat16)
    w2 = params["w2"].astype(jnp.bfloat16)
    w3 = params["w3"].astype(jnp.bfloat16)
    b1, b2, b3 = params["b1"], params["b2"], params["b3"]

    tb = _choose_tile(B, tb_max)
    n_tiles = -(-B // tb)
    Bp = n_tiles * tb
    xp = x if Bp == B else jnp.pad(x, ((0, Bp - B), (0, 0)))   # fuses under jit

    const = lambda shape: pl.BlockSpec(shape, lambda i: (0, 0))   # VMEM-resident

    flops = 2 * Bp * (S * 64 + 64 * 32 + 32 * A)
    bytes_accessed = (Bp * S * 4 + Bp * A * 4
                      + 2 * (w1.size + w2.size + w3.size)
                      + 4 * (b1.size + b2.size + b3.size))

    out = pl.pallas_call(
        actor_kernel,
        out_shape=jax.ShapeDtypeStruct((Bp, A), jnp.float32),
        grid=(n_tiles,),
        in_specs=[
            pl.BlockSpec((tb, S), lambda i: (i, 0)),   # x: streamed over batch
            const(w1.shape), const(b1.shape),          # weights/biases: fetched once
            const(w2.shape), const(b2.shape),
            const(w3.shape), const(b3.shape),
        ],
        out_specs=pl.BlockSpec((tb, A), lambda i: (i, 0)),   # narrow (A-wide) output
        compiler_params=pltpu.CompilerParams(
            dimension_semantics=("parallel",)),        # v7x: both TensorCores
        cost_estimate=pl.CostEstimate(flops=flops,
                                      transcendentals=Bp * A,
                                      bytes_accessed=bytes_accessed),
    )(xp, w1, b1, w2, b2, w3, b3)

    return out[:B]                                     # fuses under jit


def init_actor_params(key, state_dim, action_dim):
    """Deterministic init mimicking nn.Linear's U(-1/sqrt(fan_in), 1/sqrt(fan_in))."""
    dims = [(state_dim, 64), (64, 32), (32, action_dim)]
    params = {}
    for i, (fan_in, fan_out) in enumerate(dims, start=1):
        key, kw, kb = jax.random.split(key, 3)
        bound = 1.0 / jnp.sqrt(jnp.float32(fan_in))
        params[f"w{i}"] = jax.random.uniform(
            kw, (fan_in, fan_out), jnp.float32, -bound, bound)
        # biases kept 2D [1, fan_out] for TPU-friendly broadcasting in-kernel
        params[f"b{i}"] = jax.random.uniform(
            kb, (1, fan_out), jnp.float32, -bound, bound)
    return params


def actor_reference_f32(x, params):
    h1 = jnp.maximum(x @ params["w1"] + params["b1"], 0.0)
    h2 = jnp.maximum(h1 @ params["w2"] + params["b2"], 0.0)
    return jnp.tanh(h2 @ params["w3"] + params["b3"])


def actor_reference_bf16(x, params):
    """Emulates the kernel's bf16-operand / f32-accumulate numerics."""
    bf = jnp.bfloat16
    h1 = jnp.dot(x.astype(bf), params["w1"].astype(bf),
                 preferred_element_type=jnp.float32)
    h1 = jnp.maximum(h1 + params["b1"], 0.0)
    h2 = jnp.dot(h1.astype(bf), params["w2"].astype(bf),
                 preferred_element_type=jnp.float32)
    h2 = jnp.maximum(h2 + params["b2"], 0.0)
    h3 = jnp.dot(h2.astype(bf), params["w3"].astype(bf),
                 preferred_element_type=jnp.float32)
    return jnp.tanh(h3 + params["b3"])


if __name__ == "__main__":
    key = jax.random.PRNGKey(0)
    state_dim, action_dim = 16, 4

    kx, kx2, kp = jax.random.split(key, 3)
    params = init_actor_params(kp, state_dim, action_dim)

    # Small batch (single-tile path).
    x_small = jax.random.normal(kx, (8, state_dim), jnp.float32)
    out_small = jax.block_until_ready(actor_forward(x_small, params))
    assert out_small.shape == (8, action_dim)
    assert jnp.allclose(out_small, actor_reference_bf16(x_small, params),
                        atol=5e-3, rtol=5e-3)
    assert jnp.allclose(out_small, actor_reference_f32(x_small, params),
                        atol=3e-2, rtol=3e-2)

    # Larger batch exercising the multi-tile grid + minimal batch padding.
    x_big = jax.random.normal(kx2, (1030, state_dim), jnp.float32)
    out_big = jax.block_until_ready(actor_forward(x_big, params))
    assert out_big.shape == (1030, action_dim)
    assert jnp.allclose(out_big, actor_reference_bf16(x_big, params),
                        atol=5e-3, rtol=5e-3)
    assert jnp.allclose(out_big, actor_reference_f32(x_big, params),
                        atol=3e-2, rtol=3e-2)

    print("KERNEL_OK")
</pallas_src>

<mosaic_0001>
module attributes {stable_mosaic.version = 11 : i64} {
  func.func @actor_kernel(%arg0: i32, %arg1: memref<8x16xf32, #tpu.memory_space<vmem>>, %arg2: memref<16x64xbf16, #tpu.memory_space<vmem>>, %arg3: memref<1x64xf32, #tpu.memory_space<vmem>>, %arg4: memref<64x32xbf16, #tpu.memory_space<vmem>>, %arg5: memref<1x32xf32, #tpu.memory_space<vmem>>, %arg6: memref<32x4xbf16, #tpu.memory_space<vmem>>, %arg7: memref<1x4xf32, #tpu.memory_space<vmem>>, %arg8: memref<8x4xf32, #tpu.memory_space<vmem>>) attributes {dimension_semantics = [#tpu.dimension_semantics<parallel>], iteration_bounds = array<i64: 1>, scalar_prefetch = 0 : i64, scratch_operands = 0 : i64, tpu.core_type = #tpu.core_type<tc>, window_params = [{transform_indices = @transform_0, window_bounds = array<i64: 8, 16>}, {pipeline_mode = #tpu.pipeline_mode<synchronous>, transform_indices = @transform_1, window_bounds = array<i64: 16, 64>}, {pipeline_mode = #tpu.pipeline_mode<synchronous>, transform_indices = @transform_2, window_bounds = array<i64: 1, 64>}, {pipeline_mode = #tpu.pipeline_mode<synchronous>, transform_indices = @transform_3, window_bounds = array<i64: 64, 32>}, {pipeline_mode = #tpu.pipeline_mode<synchronous>, transform_indices = @transform_4, window_bounds = array<i64: 1, 32>}, {pipeline_mode = #tpu.pipeline_mode<synchronous>, transform_indices = @transform_5, window_bounds = array<i64: 32, 4>}, {pipeline_mode = #tpu.pipeline_mode<synchronous>, transform_indices = @transform_6, window_bounds = array<i64: 1, 4>}, {transform_indices = @transform_7, window_bounds = array<i64: 8, 4>}]} {
    %c0 = arith.constant 0 : index
    %c0_0 = arith.constant 0 : index
    %0 = vector.load %arg1[%c0, %c0_0] : memref<8x16xf32, #tpu.memory_space<vmem>>, vector<8x16xf32>
    %1 = arith.truncf %0 : vector<8x16xf32> to vector<8x16xbf16>
    %c0_1 = arith.constant 0 : index
    %c0_2 = arith.constant 0 : index
    %2 = vector.load %arg2[%c0_1, %c0_2] : memref<16x64xbf16, #tpu.memory_space<vmem>>, vector<16x64xbf16>
    %cst = arith.constant dense<0.000000e+00> : vector<8x64xf32>
    %3 = tpu.matmul %1, %2, %cst {dimension_numbers = #tpu.dot_dimension_numbers<[1], [0], [0], [1], [0, 0, 1, 1], [], []>} : vector<8x16xbf16>, vector<16x64xbf16>, vector<8x64xf32> -> vector<8x64xf32>
    %c0_3 = arith.constant 0 : index
    %c0_4 = arith.constant 0 : index
    %4 = vector.load %arg3[%c0_3, %c0_4] : memref<1x64xf32, #tpu.memory_space<vmem>>, vector<1x64xf32>
    %5 = vector.broadcast %4 : vector<1x64xf32> to vector<8x64xf32>
    %6 = arith.addf %3, %5 : vector<8x64xf32>
    %cst_5 = arith.constant 0.000000e+00 : f32
    %7 = vector.broadcast %cst_5 : f32 to vector<8x64xf32>
    %8 = arith.maximumf %6, %7 : vector<8x64xf32>
    %9 = arith.truncf %8 : vector<8x64xf32> to vector<8x64xbf16>
    %c0_6 = arith.constant 0 : index
    %c0_7 = arith.constant 0 : index
    %10 = vector.load %arg4[%c0_6, %c0_7] : memref<64x32xbf16, #tpu.memory_space<vmem>>, vector<64x32xbf16>
    %cst_8 = arith.constant dense<0.000000e+00> : vector<8x32xf32>
    %11 = tpu.matmul %9, %10, %cst_8 {dimension_numbers = #tpu.dot_dimension_numbers<[1], [0], [0], [1], [0, 0, 1, 1], [], []>} : vector<8x64xbf16>, vector<64x32xbf16>, vector<8x32xf32> -> vector<8x32xf32>
    %c0_9 = arith.constant 0 : index
    %c0_10 = arith.constant 0 : index
    %12 = vector.load %arg5[%c0_9, %c0_10] : memref<1x32xf32, #tpu.memory_space<vmem>>, vector<1x32xf32>
    %13 = vector.broadcast %12 : vector<1x32xf32> to vector<8x32xf32>
    %14 = arith.addf %11, %13 : vector<8x32xf32>
    %cst_11 = arith.constant 0.000000e+00 : f32
    %15 = vector.broadcast %cst_11 : f32 to vector<8x32xf32>
    %16 = arith.maximumf %14, %15 : vector<8x32xf32>
    %17 = arith.truncf %16 : vector<8x32xf32> to vector<8x32xbf16>
    %c0_12 = arith.constant 0 : index
    %c0_13 = arith.constant 0 : index
    %18 = vector.load %arg6[%c0_12, %c0_13] : memref<32x4xbf16, #tpu.memory_space<vmem>>, vector<32x4xbf16>
    %cst_14 = arith.constant dense<0.000000e+00> : vector<8x4xf32>
    %19 = tpu.matmul %17, %18, %cst_14 {dimension_numbers = #tpu.dot_dimension_numbers<[1], [0], [0], [1], [0, 0, 1, 1], [], []>} : vector<8x32xbf16>, vector<32x4xbf16>, vector<8x4xf32> -> vector<8x4xf32>
    %c0_15 = arith.constant 0 : index
    %c0_16 = arith.constant 0 : index
    %20 = vector.load %arg7[%c0_15, %c0_16] : memref<1x4xf32, #tpu.memory_space<vmem>>, vector<1x4xf32>
    %21 = vector.broadcast %20 : vector<1x4xf32> to vector<8x4xf32>
    %22 = arith.addf %19, %21 : vector<8x4xf32>
    %23 = math.tanh %22 : vector<8x4xf32>
    %c0_17 = arith.constant 0 : index
    %c0_18 = arith.constant 0 : index
    %24 = vector.load %arg8[%c0_17, %c0_18] : memref<8x4xf32, #tpu.memory_space<vmem>>, vector<8x4xf32>
    tpu.vector_store %arg8[%c0_17, %c0_18], %23 {strides = array<i32>} : memref<8x4xf32, #tpu.memory_space<vmem>>, vector<8x4xf32>,
    return
  }
  func.func @transform_0(%arg0: i32) -> (i32, i32) {
    %c0_i32 = arith.constant 0 : i32
    %c0_i32_0 = arith.constant 0 : i32
    return %arg0, %c0_i32 : i32, i32
  }
  func.func @transform_1(%arg0: i32) -> (i32, i32) {
    %c0_i32 = arith.constant 0 : i32
    %c0_i32_0 = arith.constant 0 : i32
    %c0_i32_1 = arith.constant 0 : i32
    return %c0_i32, %c0_i32_0 : i32, i32
  }
  func.func @transform_2(%arg0: i32) -> (i32, i32) {
    %c0_i32 = arith.constant 0 : i32
    %c0_i32_0 = arith.constant 0 : i32
    %c0_i32_1 = arith.constant 0 : i32
    return %c0_i32, %c0_i32_0 : i32, i32
  }
  func.func @transform_3(%arg0: i32) -> (i32, i32) {
    %c0_i32 = arith.constant 0 : i32
    %c0_i32_0 = arith.constant 0 : i32
    %c0_i32_1 = arith.constant 0 : i32
    return %c0_i32, %c0_i32_0 : i32, i32
  }
  func.func @transform_4(%arg0: i32) -> (i32, i32) {
    %c0_i32 = arith.constant 0 : i32
    %c0_i32_0 = arith.constant 0 : i32
    %c0_i32_1 = arith.constant 0 : i32
    return %c0_i32, %c0_i32_0 : i32, i32
  }
  func.func @transform_5(%arg0: i32) -> (i32, i32) {
    %c0_i32 = arith.constant 0 : i32
    %c0_i32_0 = arith.constant 0 : i32
    %c0_i32_1 = arith.constant 0 : i32
    return %c0_i32, %c0_i32_0 : i32, i32
  }
  func.func @transform_6(%arg0: i32) -> (i32, i32) {
    %c0_i32 = arith.constant 0 : i32
    %c0_i32_0 = arith.constant 0 : i32
    %c0_i32_1 = arith.constant 0 : i32
    return %c0_i32, %c0_i32_0 : i32, i32
  }
  func.func @transform_7(%arg0: i32) -> (i32, i32) {
    %c0_i32 = arith.constant 0 : i32
    %c0_i32_0 = arith.constant 0 : i32
    return %arg0, %c0_i32 : i32, i32
  }
}

</mosaic_0001>

<llo_original>
// kernel: actor_forward.1
$region0: #{actor_forward.1}
  #allocation0 [shape = 'u32[]', space=smem, size = 0x4, offset = 0x4, fixed_abs, tag = 'smem constant byte address 0x4 - core index']
  #allocation1 [shape = 'u32[72,128]{1,0:T(1,128)}', space=vmem, size = 0x9000, scoped, tag = 'internal scratch']
  %s0 = inlined_call_operand.vmem [shape: f32[8,16], index: 0, kind: input, shape index: {}]
  %s1 = inlined_call_operand.vmem [shape: bf16[16,64], index: 1, kind: input, shape index: {}]
  %s2 = inlined_call_operand.vmem [shape: f32[1,64], index: 2, kind: input, shape index: {}]
  %s3 = inlined_call_operand.vmem [shape: bf16[64,32], index: 3, kind: input, shape index: {}]
  %s4 = inlined_call_operand.vmem [shape: f32[1,32], index: 4, kind: input, shape index: {}]
  %s5 = inlined_call_operand.vmem [shape: bf16[32,4], index: 5, kind: input, shape index: {}]
  %s6 = inlined_call_operand.vmem [shape: f32[1,4], index: 6, kind: input, shape index: {}]
  %s7 = inlined_call_operand.vmem [shape: f32[8,4], index: 7, kind: output, shape index: {}]
  %s8 = sld [smem:[#allocation0]]
  $region38: #{actor_forward.1} parent=0
    _
  %s10 = ssub.s32 1, %s8
  %s11 = scalar_select 0, %s10, %s8
  // Predicated region
  $region2: #{actor_forward.1} parent=0 // pred_check
    _
  $region3: #{actor_forward.1} parent=0 // pred_check_branch
    %13 = sbr.rel (0) target = $region5
  $region4: #{actor_forward.1} parent=0 // pred_region
    _
  $region5: #{actor_forward.1} parent=0 // pred_fallthru
    _
  // Predicated region
  $region6: #{actor_forward.1} parent=0 // pred_check
    _
  $region7: #{actor_forward.1} parent=0 // pred_check_branch
    %15 = sbr.rel (0) target = $region9
  $region8: #{actor_forward.1} parent=0 // pred_region
    _
  $region9: #{actor_forward.1} parent=0 // pred_fallthru
    _
  // Predicated region
  $region10: #{actor_forward.1} parent=0 // pred_check
    _
  $region11: #{actor_forward.1} parent=0 // pred_check_branch
    %17 = sbr.rel (0) target = $region13
  $region12: #{actor_forward.1} parent=0 // pred_region
    _
  $region13: #{actor_forward.1} parent=0 // pred_fallthru
    _
  // Predicated region
  $region14: #{actor_forward.1} parent=0 // pred_check
    _
  $region15: #{actor_forward.1} parent=0 // pred_check_branch
    %19 = sbr.rel (0) target = $region17
  $region16: #{actor_forward.1} parent=0 // pred_region
    _
  $region17: #{actor_forward.1} parent=0 // pred_fallthru
    _
  // Predicated region
  $region18: #{actor_forward.1} parent=0 // pred_check
    _
  $region19: #{actor_forward.1} parent=0 // pred_check_branch
    %21 = sbr.rel (0) target = $region21
  $region20: #{actor_forward.1} parent=0 // pred_region
    _
  $region21: #{actor_forward.1} parent=0 // pred_fallthru
    _
  // Predicated region
  $region22: #{actor_forward.1} parent=0 // pred_check
    _
  $region23: #{actor_forward.1} parent=0 // pred_check_branch
    %23 = sbr.rel (0) target = $region25
  $region24: #{actor_forward.1} parent=0 // pred_region
    _
  $region25: #{actor_forward.1} parent=0 // pred_fallthru
    _
  // Predicated region
  $region26: #{actor_forward.1} parent=0 // pred_check
    _
  $region27: #{actor_forward.1} parent=0 // pred_check_branch
    %25 = sbr.rel (0) target = $region29
  $region28: #{actor_forward.1} parent=0 // pred_region
    _
  $region29: #{actor_forward.1} parent=0 // pred_fallthru
    _
  %v27 = vld [vmem:[%s0] sm:$0xff]
  %v28 = vpack.c.bf16 %v27, %v27
  %v29 = vld [vmem:[%s1] sm:$0xf]
  %v30 = vld [vmem:[%s1 + $0x4] sm:$0xf]
  %v31 = vld [vmem:[%s2] sm:$0x1]
  %v33 = vperm.slane %v31, 0
  %v37 = vunpack.c.l.b16 %v29
  %v38 = vunpack.c.l.b16 %v30
  %v39 = vpack.c.b16 %v38, %v37
  %vm41 = vcmask 130048
  %v43 = vsel %vm41, %v28, 0
  %45 = vmatpush.bf16.msra.mxu0 0
  %46 = vmatpush.bf16.msra.mxu0 0
  %47 = vmatpush.bf16.msra.mxu0 0
  %48 = vmatpush.bf16.msra.mxu0 0
  %49 = vmatpush.bf16.msra.mxu0 0
  %50 = vmatpush.bf16.msra.mxu0 0
  %51 = vmatpush.bf16.msra.mxu0 0
  %52 = vmatpush.bf16.msra.mxu0 %v39
  %53 = vmatmul.bf16.gmra.mxu0 %v43
  %v54 = vpop.f32.mrf.mxu0
  %v55 = vadd.f32 %v33, %v54
  %v56 = vpop.f32.mrf.mxu0
  %57 = vdwg.mxu0
  %v58 = vmax.f32 %v55, 0.0
  %v59 = vpack.c.bf16 %v58, %v58
  %v60 = vld [vmem:[%s3] sm:$0xf]
  %v61 = vld [vmem:[%s3 + $0x4] sm:$0xf]
  %v62 = vld [vmem:[%s3 + $0x8] sm:$0xf]
  %v63 = vld [vmem:[%s3 + $0xc] sm:$0xf]
  %v64 = vld [vmem:[%s3 + $0x10] sm:$0xf]
  %v65 = vld [vmem:[%s3 + $0x14] sm:$0xf]
  %v66 = vld [vmem:[%s3 + $0x18] sm:$0xf]
  %v67 = vld [vmem:[%s3 + $0x1c] sm:$0xf]
  %v68 = vld [vmem:[%s4] sm:$0x1]
  %v70 = vperm.slane %v68, 0
  %v80 = vunpack.c.l.b16 %v60
  %v81 = vunpack.c.l.b16 %v61
  %v82 = vunpack.c.l.b16 %v62
  %v83 = vunpack.c.l.b16 %v63
  %v84 = vunpack.c.l.b16 %v64
  %v85 = vunpack.c.l.b16 %v65
  %v86 = vunpack.c.l.b16 %v66
  %v87 = vunpack.c.l.b16 %v67
  %v88 = vpack.c.b16 %v81, %v80
  %v89 = vpack.c.b16 %v83, %v82
  %v90 = vpack.c.b16 %v85, %v84
  %v91 = vpack.c.b16 %v87, %v86
  %vm96 = vcmask 523264
  %v98 = vsel %vm96, %v59, 0
  %100 = vmatpush.bf16.msra.mxu0 0
  %101 = vmatpush.bf16.msra.mxu0 0
  %102 = vmatpush.bf16.msra.mxu0 0
  %103 = vmatpush.bf16.msra.mxu0 0
  %104 = vmatpush.bf16.msra.mxu0 %v91
  %105 = vmatpush.bf16.msra.mxu0 %v90
  %106 = vmatpush.bf16.msra.mxu0 %v89
  %107 = vmatpush.bf16.msra.mxu0 %v88
  %108 = vmatmul.bf16.gmra.mxu0 %v98
  %v109 = vpop.f32.mrf.mxu0
  %v110 = vadd.f32 %v70, %v109
  %v111 = vpop.f32.mrf.mxu0
  %112 = vdwg.mxu0
  %v113 = vmax.f32 %v110, 0.0
  %v114 = vpack.c.bf16 %v113, %v113
  %v115 = vld [vmem:[%s5] sm:$0xf]
  %v116 = vld [vmem:[%s5 + $0x4] sm:$0xf]
  %v117 = vld [vmem:[%s5 + $0x8] sm:$0xf]
  %v118 = vld [vmem:[%s5 + $0xc] sm:$0xf]
  %v119 = vld [vmem:[%s6] sm:$0x1]
  %v121 = vperm.slane %v119, 0
  %v127 = vunpack.c.l.b16 %v115
  %v128 = vunpack.c.l.b16 %v116
  %v129 = vunpack.c.l.b16 %v117
  %v130 = vunpack.c.l.b16 %v118
  %v131 = vpack.c.b16 %v128, %v127
  %v132 = vpack.c.b16 %v130, %v129
  %vm135 = vcmask 261120
  %v137 = vsel %vm135, %v114, 0
  %139 = vmatpush.bf16.msra.mxu0 0
  %140 = vmatpush.bf16.msra.mxu0 0
  %141 = vmatpush.bf16.msra.mxu0 0
  %142 = vmatpush.bf16.msra.mxu0 0
  %143 = vmatpush.bf16.msra.mxu0 0
  %144 = vmatpush.bf16.msra.mxu0 0
  %145 = vmatpush.bf16.msra.mxu0 %v132
  %146 = vmatpush.bf16.msra.mxu0 %v131
  %147 = vmatmul.bf16.gmra.mxu0 %v137
  %v148 = vpop.f32.mrf.mxu0
  %v149 = vadd.f32 %v121, %v148
  %v150 = vpop.f32.mrf.mxu0
  %151 = vdwg.mxu0
  %v152 = vtanh.pop %v149
  %vm153 = vcmask 31744
  %154 = vst.msk [vmem:[%s7] sm:$0xff] %vm153, %v152
  // Predicated region
  $region30: #{actor_forward.1} parent=0 // pred_check
    _
  $region31: #{actor_forward.1} parent=0 // pred_check_branch
    %156 = sbr.rel (0) target = $region33
  $region32: #{actor_forward.1} parent=0 // pred_region
    _
  $region33: #{actor_forward.1} parent=0 // pred_fallthru
    _
  // Predicated region
  $region34: #{actor_forward.1} parent=0 // pred_check
    _
  $region35: #{actor_forward.1} parent=0 // pred_check_branch
    %158 = sbr.rel (0) target = $region37
  $region36: #{actor_forward.1} parent=0 // pred_region
    _
  $region37: #{actor_forward.1} parent=0 // pred_fallthru
    _

</llo_original>
